<compile_context>
chip_gen: v5e
topology: v5e:2x2
jax: 0.10.0
libtpu: 0.0.40
codegen_flags: <defaults>
</compile_context>

<pallas_src>
import functools

import jax
import jax.numpy as jnp
from jax.experimental import pallas as pl
from jax.experimental.pallas import tpu as pltpu


def _l2_normalize(x):
    # torch F.normalize(p=2, dim=1, eps=1e-12): x / max(||x||, eps)
    # == x * rsqrt(max(||x||^2, eps^2))
    x = x.astype(jnp.float32)
    sumsq = jnp.sum(x * x, axis=1, keepdims=True)
    return x * jax.lax.rsqrt(jnp.maximum(sumsq, jnp.float32(1e-24)))


def _contrastive_loss_kernel(z1_ref, z2_ref, o_ref, *, inv_temp):
    """z1_ref/z2_ref: resident, already L2-normalized [B, D] embeddings.

    o_ref: [tb, 1] per-row loss_i + loss_{B+i} for this row tile.
    """
    tb = o_ref.shape[0]            # rows handled by this grid step
    batch = z1_ref.shape[0]        # full batch (column side)
    step = pl.program_id(0)

    it = jnp.float32(inv_temp)

    # Row tiles sliced from the resident column blocks (no extra HBM stream).
    row0 = pl.multiple_of(step * tb, tb)
    rows = pl.ds(row0, tb)
    z1r = z1_ref[rows, :]                       # [tb, D]
    z2r = z2_ref[rows, :]                       # [tb, D]
    z1r_f = z1r.astype(jnp.float32)
    z2r_f = z2r.astype(jnp.float32)

    # Positives (already scaled by 1/T): <z1_k, z2_k> / T.
    pos_it = jnp.sum(z1r_f * z2r_f, axis=1, keepdims=True) * it   # [tb, 1]

    # Fold 1/T into the row-side operand so every Gram block comes out
    # pre-scaled (drops four [tb, B] multiplies).
    z1r_s = (z1r_f * it).astype(z1_ref.dtype)
    z2r_s = (z2r_f * it).astype(z2_ref.dtype)

    # Resident column operands (bf16 if use_bf16_matmul).
    z1f = z1_ref[...]                           # [B, D]
    z2f = z2_ref[...]                           # [B, D]

    # NT contraction (last dim of both operands), flash-attention style q.k^T:
    # no transposed [B, D] copy is materialized in the kernel.
    dn = (((1,), (1,)), ((), ()))

    # Diagonal (self-similarity) mask: only the S11 / S22 blocks of the virtual
    # 2B x 2B similarity matrix contain main-diagonal entries.
    row_g = jax.lax.broadcasted_iota(jnp.int32, (tb, batch), 0) + step * tb
    col = jax.lax.broadcasted_iota(jnp.int32, (tb, batch), 1)
    is_diag = row_g == col
    zero = jnp.float32(0.0)

    # --- rows of the z_i half: denom1 = sum_col mask*exp(S11/T) + exp(S12/T) --
    # Per-block pipeline: dot -> mask -> exp -> accumulate, one reduction.
    s = jax.lax.dot_general(z1r_s, z1f, dn, preferred_element_type=jnp.float32)
    acc = jnp.where(is_diag, zero, jnp.exp(s))
    s = jax.lax.dot_general(z1r_s, z2f, dn, preferred_element_type=jnp.float32)
    acc = acc + jnp.exp(s)
    denom1 = jnp.sum(acc, axis=1, keepdims=True)                  # [tb, 1]

    # --- rows of the z_j half: denom2 = sum_col exp(S21/T) + mask*exp(S22/T) --
    s = jax.lax.dot_general(z2r_s, z1f, dn, preferred_element_type=jnp.float32)
    acc = jnp.exp(s)
    s = jax.lax.dot_general(z2r_s, z2f, dn, preferred_element_type=jnp.float32)
    acc = acc + jnp.where(is_diag, zero, jnp.exp(s))
    denom2 = jnp.sum(acc, axis=1, keepdims=True)                  # [tb, 1]

    # -log(exp(pos/T) / denom) = log(denom) - pos/T ; emit loss_i + loss_{B+i}.
    o_ref[...] = jnp.log(denom1) + jnp.log(denom2) - 2.0 * pos_it


def contrastive_loss(proj_1, proj_2, temperature=0.5, row_tile=None,
                     use_bf16_matmul=False):
    batch, dim = proj_1.shape
    assert proj_2.shape == (batch, dim)

    # Row-tile selection: MXU-friendly default, multiple of 8 (f32 sublane).
    if row_tile is None:
        tb = batch if batch <= 256 else 256
    else:
        tb = min(int(row_tile), batch)
    assert batch % tb == 0, "row_tile must divide batch"
    assert tb == batch or tb % 8 == 0, "row_tile must be a multiple of 8"
    grid = (batch // tb,)

    # Normalize ONCE in the wrapper (single fused HBM pass); the kernel only
    # consumes normalized embeddings.
    z1 = _l2_normalize(proj_1)
    z2 = _l2_normalize(proj_2)
    if use_bf16_matmul:
        # ~2-3x MXU throughput and half the resident VMEM; tolerance ~1e-3.
        z1 = z1.astype(jnp.bfloat16)
        z2 = z2.astype(jnp.bfloat16)

    kernel = functools.partial(
        _contrastive_loss_kernel, inv_temp=1.0 / float(temperature)
    )

    # Explicit VMEM budget with headroom, clamped to the chip's physical VMEM
    # (v7x has 64 MiB/TC vs 128 MiB on v5e/v6e).
    itemsize = jnp.dtype(z1.dtype).itemsize
    est = (2 * batch * dim * itemsize        # resident columns (single-buffered)
           + 3 * tb * batch * 4              # live [tb, B] f32 temporaries
           + 6 * tb * dim * 4                # row tiles + scaled copies
           + (2 << 20))                      # headroom
    try:
        vmem_cap = int(pltpu.get_tpu_info().vmem_capacity_bytes)
    except Exception:
        vmem_cap = 64 << 20
    vmem_limit = int(min(max(est, 32 << 20), int(vmem_cap * 0.9)))

    def build(resident_spec):
        return pl.pallas_call(
            kernel,
            out_shape=jax.ShapeDtypeStruct((batch, 1), jnp.float32),
            grid=grid,
            in_specs=[resident_spec, resident_spec],
            out_specs=pl.BlockSpec((tb, 1), lambda i: (i, 0)),
            compiler_params=pltpu.CompilerParams(
                dimension_semantics=("parallel",),
                vmem_limit_bytes=vmem_limit,
            ),
        )

    try:
        # A constant-index resident block never needs double buffering.
        resident = pl.BlockSpec((batch, dim), lambda i: (0, 0),
                                pipeline_mode=pl.Buffered(1))
        per_row = build(resident)(z1, z2)
    except Exception:
        # Fallback if single-buffered pipeline_mode is not supported here.
        resident = pl.BlockSpec((batch, dim), lambda i: (0, 0))
        per_row = build(resident)(z1, z2)

    # Final mean folded into the wrapper (cheap scalar reduce, fuses in XLA).
    return jnp.sum(per_row) / (2.0 * batch)


def _reference_loss(proj_1, proj_2, temperature=0.5):
    # Pure-JAX reference mirroring the PyTorch module.
    batch = proj_1.shape[0]
    z1 = proj_1 / jnp.maximum(jnp.linalg.norm(proj_1, axis=1, keepdims=True), 1e-12)
    z2 = proj_2 / jnp.maximum(jnp.linalg.norm(proj_2, axis=1, keepdims=True), 1e-12)
    reps = jnp.concatenate([z1, z2], axis=0)
    sim = reps @ reps.T
    mask = 1.0 - jnp.eye(2 * batch, dtype=jnp.float32)
    sim_ij = jnp.diagonal(sim, offset=batch)
    sim_ji = jnp.diagonal(sim, offset=-batch)
    positives = jnp.concatenate([sim_ij, sim_ji], axis=0)
    nominator = jnp.exp(positives / temperature)
    denominator = mask * jnp.exp(sim / temperature)
    all_losses = -jnp.log(nominator / jnp.sum(denominator, axis=1))
    return jnp.sum(all_losses) / (2 * batch)


if __name__ == "__main__":
    key = jax.random.PRNGKey(0)
    k1, k2 = jax.random.split(key)

    # Small, single-tile case.
    batch, dim = 8, 32
    proj_1 = jax.random.normal(k1, (batch, dim), dtype=jnp.float32)
    proj_2 = jax.random.normal(k2, (batch, dim), dtype=jnp.float32)
    loss = jax.block_until_ready(contrastive_loss(proj_1, proj_2, temperature=0.5))
    ref = _reference_loss(proj_1, proj_2, temperature=0.5)
    assert jnp.allclose(loss, ref, atol=1e-5, rtol=1e-5), (loss, ref)

    # Multi-tile case exercising the in-kernel row slicing (grid of 2).
    batch2 = 16
    p1b = jax.random.normal(k1, (batch2, dim), dtype=jnp.float32)
    p2b = jax.random.normal(k2, (batch2, dim), dtype=jnp.float32)
    loss2 = jax.block_until_ready(
        contrastive_loss(p1b, p2b, temperature=0.5, row_tile=8))
    ref2 = _reference_loss(p1b, p2b, temperature=0.5)
    assert jnp.allclose(loss2, ref2, atol=1e-5, rtol=1e-5), (loss2, ref2)

    print("KERNEL_OK")
</pallas_src>

<mosaic_0001>
module attributes {stable_mosaic.version = 11 : i64} {
  func.func @_contrastive_loss_kernel(%arg0: i32, %arg1: memref<8x32xf32, #tpu.memory_space<vmem>>, %arg2: memref<8x32xf32, #tpu.memory_space<vmem>>, %arg3: memref<8x1xf32, #tpu.memory_space<vmem>>) attributes {dimension_semantics = [#tpu.dimension_semantics<parallel>], iteration_bounds = array<i64: 1>, scalar_prefetch = 0 : i64, scratch_operands = 0 : i64, tpu.core_type = #tpu.core_type<tc>, window_params = [{pipeline_mode = #tpu.pipeline_mode<synchronous>, transform_indices = @transform_0, window_bounds = array<i64: 8, 32>}, {pipeline_mode = #tpu.pipeline_mode<synchronous>, transform_indices = @transform_1, window_bounds = array<i64: 8, 32>}, {transform_indices = @transform_2, window_bounds = array<i64: 8, 1>}]} {
    %c8_i32 = arith.constant 8 : i32
    %0 = arith.muli %arg0, %c8_i32 : i32
    %1 = tpu.assume_multiple %0, 8 : i32
    %2 = arith.index_cast %1 : i32 to index
    %c0 = arith.constant 0 : index
    %3 = vector.load %arg1[%2, %c0] : memref<8x32xf32, #tpu.memory_space<vmem>>, vector<8x32xf32>
    %4 = arith.index_cast %1 : i32 to index
    %c0_0 = arith.constant 0 : index
    %5 = vector.load %arg2[%4, %c0_0] : memref<8x32xf32, #tpu.memory_space<vmem>>, vector<8x32xf32>
    %6 = arith.mulf %3, %5 : vector<8x32xf32>
    %cst = arith.constant dense<0.000000e+00> : vector<8xf32>
    %7 = vector.multi_reduction <add>, %6, %cst [1] : vector<8x32xf32> to vector<8xf32>
    %8 = vector.shape_cast %7 : vector<8xf32> to vector<8x1xf32>
    %cst_1 = arith.constant 2.000000e+00 : f32
    %9 = vector.broadcast %cst_1 : f32 to vector<8x1xf32>
    %10 = arith.mulf %8, %9 : vector<8x1xf32>
    %cst_2 = arith.constant 2.000000e+00 : f32
    %11 = vector.broadcast %cst_2 : f32 to vector<8x32xf32>
    %12 = arith.mulf %3, %11 : vector<8x32xf32>
    %cst_3 = arith.constant 2.000000e+00 : f32
    %13 = vector.broadcast %cst_3 : f32 to vector<8x32xf32>
    %14 = arith.mulf %5, %13 : vector<8x32xf32>
    %c0_4 = arith.constant 0 : index
    %c0_5 = arith.constant 0 : index
    %15 = vector.load %arg1[%c0_4, %c0_5] : memref<8x32xf32, #tpu.memory_space<vmem>>, vector<8x32xf32>
    %c0_6 = arith.constant 0 : index
    %c0_7 = arith.constant 0 : index
    %16 = vector.load %arg2[%c0_6, %c0_7] : memref<8x32xf32, #tpu.memory_space<vmem>>, vector<8x32xf32>
    %17 = tpu.iota {dimensions = array<i32: 0>} : vector<8x8xi32>
    %c8_i32_8 = arith.constant 8 : i32
    %18 = arith.muli %arg0, %c8_i32_8 : i32
    %19 = vector.broadcast %18 : i32 to vector<8x8xi32>
    %20 = arith.addi %17, %19 : vector<8x8xi32>
    %21 = tpu.iota {dimensions = array<i32: 1>} : vector<8x8xi32>
    %22 = arith.cmpi eq, %20, %21 : vector<8x8xi32>
    %cst_9 = arith.constant dense<0.000000e+00> : vector<8x8xf32>
    %23 = tpu.matmul %12, %15, %cst_9 {dimension_numbers = #tpu.dot_dimension_numbers<[1], [1], [0], [0], [0, 0, 1, 0], [], []>} : vector<8x32xf32>, vector<8x32xf32>, vector<8x8xf32> -> vector<8x8xf32>
    %24 = math.exp %23 : vector<8x8xf32>
    %cst_10 = arith.constant 0.000000e+00 : f32
    %25 = vector.broadcast %cst_10 : f32 to vector<8x8xf32>
    %26 = arith.select %22, %25, %24 : vector<8x8xi1>, vector<8x8xf32>
    %cst_11 = arith.constant dense<0.000000e+00> : vector<8x8xf32>
    %27 = tpu.matmul %12, %16, %cst_11 {dimension_numbers = #tpu.dot_dimension_numbers<[1], [1], [0], [0], [0, 0, 1, 0], [], []>} : vector<8x32xf32>, vector<8x32xf32>, vector<8x8xf32> -> vector<8x8xf32>
    %28 = math.exp %27 : vector<8x8xf32>
    %29 = arith.addf %26, %28 : vector<8x8xf32>
    %cst_12 = arith.constant dense<0.000000e+00> : vector<8xf32>
    %30 = vector.multi_reduction <add>, %29, %cst_12 [1] : vector<8x8xf32> to vector<8xf32>
    %31 = vector.shape_cast %30 : vector<8xf32> to vector<8x1xf32>
    %cst_13 = arith.constant dense<0.000000e+00> : vector<8x8xf32>
    %32 = tpu.matmul %14, %15, %cst_13 {dimension_numbers = #tpu.dot_dimension_numbers<[1], [1], [0], [0], [0, 0, 1, 0], [], []>} : vector<8x32xf32>, vector<8x32xf32>, vector<8x8xf32> -> vector<8x8xf32>
    %33 = math.exp %32 : vector<8x8xf32>
    %cst_14 = arith.constant dense<0.000000e+00> : vector<8x8xf32>
    %34 = tpu.matmul %14, %16, %cst_14 {dimension_numbers = #tpu.dot_dimension_numbers<[1], [1], [0], [0], [0, 0, 1, 0], [], []>} : vector<8x32xf32>, vector<8x32xf32>, vector<8x8xf32> -> vector<8x8xf32>
    %35 = math.exp %34 : vector<8x8xf32>
    %cst_15 = arith.constant 0.000000e+00 : f32
    %36 = vector.broadcast %cst_15 : f32 to vector<8x8xf32>
    %37 = arith.select %22, %36, %35 : vector<8x8xi1>, vector<8x8xf32>
    %38 = arith.addf %33, %37 : vector<8x8xf32>
    %cst_16 = arith.constant dense<0.000000e+00> : vector<8xf32>
    %39 = vector.multi_reduction <add>, %38, %cst_16 [1] : vector<8x8xf32> to vector<8xf32>
    %40 = vector.shape_cast %39 : vector<8xf32> to vector<8x1xf32>
    %41 = math.log %31 : vector<8x1xf32>
    %42 = math.log %40 : vector<8x1xf32>
    %43 = arith.addf %41, %42 : vector<8x1xf32>
    %cst_17 = arith.constant 2.000000e+00 : f32
    %44 = vector.broadcast %cst_17 : f32 to vector<8x1xf32>
    %45 = arith.mulf %44, %10 : vector<8x1xf32>
    %46 = arith.subf %43, %45 : vector<8x1xf32>
    %c0_18 = arith.constant 0 : index
    %c0_19 = arith.constant 0 : index
    %47 = vector.load %arg3[%c0_18, %c0_19] : memref<8x1xf32, #tpu.memory_space<vmem>>, vector<8x1xf32>
    tpu.vector_store %arg3[%c0_18, %c0_19], %46 {strides = array<i32>} : memref<8x1xf32, #tpu.memory_space<vmem>>, vector<8x1xf32>,
    return
  }
  func.func @transform_0(%arg0: i32) -> (i32, i32) {
    %c0_i32 = arith.constant 0 : i32
    %c0_i32_0 = arith.constant 0 : i32
    %c0_i32_1 = arith.constant 0 : i32
    return %c0_i32, %c0_i32_0 : i32, i32
  }
  func.func @transform_1(%arg0: i32) -> (i32, i32) {
    %c0_i32 = arith.constant 0 : i32
    %c0_i32_0 = arith.constant 0 : i32
    %c0_i32_1 = arith.constant 0 : i32
    return %c0_i32, %c0_i32_0 : i32, i32
  }
  func.func @transform_2(%arg0: i32) -> (i32, i32) {
    %c0_i32 = arith.constant 0 : i32
    %c0_i32_0 = arith.constant 0 : i32
    return %arg0, %c0_i32 : i32, i32
  }
}

module attributes {stable_mosaic.version = 11 : i64} {
  func.func @_contrastive_loss_kernel(%arg0: i32, %arg1: memref<8x32xf32, #tpu.memory_space<vmem>>, %arg2: memref<8x32xf32, #tpu.memory_space<vmem>>, %arg3: memref<8x1xf32, #tpu.memory_space<vmem>>) attributes {dimension_semantics = [#tpu.dimension_semantics<parallel>], iteration_bounds = array<i64: 1>, scalar_prefetch = 0 : i64, scratch_operands = 0 : i64, tpu.core_type = #tpu.core_type<tc>, window_params = [{pipeline_mode = #tpu.pipeline_mode<synchronous>, transform_indices = @transform_0, window_bounds = array<i64: 8, 32>}, {pipeline_mode = #tpu.pipeline_mode<synchronous>, transform_indices = @transform_1, window_bounds = array<i64: 8, 32>}, {transform_indices = @transform_2, window_bounds = array<i64: 8, 1>}]} {
    %c8_i32 = arith.constant 8 : i32
    %0 = arith.muli %arg0, %c8_i32 : i32
    %1 = tpu.assume_multiple %0, 8 : i32
    %2 = arith.index_cast %1 : i32 to index
    %c0 = arith.constant 0 : index
    %3 = vector.load %arg1[%2, %c0] : memref<8x32xf32, #tpu.memory_space<vmem>>, vector<8x32xf32>
    %4 = arith.index_cast %1 : i32 to index
    %c0_0 = arith.constant 0 : index
    %5 = vector.load %arg2[%4, %c0_0] : memref<8x32xf32, #tpu.memory_space<vmem>>, vector<8x32xf32>
    %6 = arith.mulf %3, %5 : vector<8x32xf32>
    %cst = arith.constant dense<0.000000e+00> : vector<8xf32>
    %7 = vector.multi_reduction <add>, %6, %cst [1] : vector<8x32xf32> to vector<8xf32>
    %8 = vector.shape_cast %7 : vector<8xf32> to vector<8x1xf32>
    %cst_1 = arith.constant 2.000000e+00 : f32
    %9 = vector.broadcast %cst_1 : f32 to vector<8x1xf32>
    %10 = arith.mulf %8, %9 : vector<8x1xf32>
    %cst_2 = arith.constant 2.000000e+00 : f32
    %11 = vector.broadcast %cst_2 : f32 to vector<8x32xf32>
    %12 = arith.mulf %3, %11 : vector<8x32xf32>
    %cst_3 = arith.constant 2.000000e+00 : f32
    %13 = vector.broadcast %cst_3 : f32 to vector<8x32xf32>
    %14 = arith.mulf %5, %13 : vector<8x32xf32>
    %c0_4 = arith.constant 0 : index
    %c0_5 = arith.constant 0 : index
    %15 = vector.load %arg1[%c0_4, %c0_5] : memref<8x32xf32, #tpu.memory_space<vmem>>, vector<8x32xf32>
    %c0_6 = arith.constant 0 : index
    %c0_7 = arith.constant 0 : index
    %16 = vector.load %arg2[%c0_6, %c0_7] : memref<8x32xf32, #tpu.memory_space<vmem>>, vector<8x32xf32>
    %17 = tpu.iota {dimensions = array<i32: 0>} : vector<8x8xi32>
    %c8_i32_8 = arith.constant 8 : i32
    %18 = arith.muli %arg0, %c8_i32_8 : i32
    %19 = vector.broadcast %18 : i32 to vector<8x8xi32>
    %20 = arith.addi %17, %19 : vector<8x8xi32>
    %21 = tpu.iota {dimensions = array<i32: 1>} : vector<8x8xi32>
    %22 = arith.cmpi eq, %20, %21 : vector<8x8xi32>
    %cst_9 = arith.constant dense<0.000000e+00> : vector<8x8xf32>
    %23 = tpu.matmul %12, %15, %cst_9 {dimension_numbers = #tpu.dot_dimension_numbers<[1], [1], [0], [0], [0, 0, 1, 0], [], []>} : vector<8x32xf32>, vector<8x32xf32>, vector<8x8xf32> -> vector<8x8xf32>
    %24 = math.exp %23 : vector<8x8xf32>
    %cst_10 = arith.constant 0.000000e+00 : f32
    %25 = vector.broadcast %cst_10 : f32 to vector<8x8xf32>
    %26 = arith.select %22, %25, %24 : vector<8x8xi1>, vector<8x8xf32>
    %cst_11 = arith.constant dense<0.000000e+00> : vector<8x8xf32>
    %27 = tpu.matmul %12, %16, %cst_11 {dimension_numbers = #tpu.dot_dimension_numbers<[1], [1], [0], [0], [0, 0, 1, 0], [], []>} : vector<8x32xf32>, vector<8x32xf32>, vector<8x8xf32> -> vector<8x8xf32>
    %28 = math.exp %27 : vector<8x8xf32>
    %29 = arith.addf %26, %28 : vector<8x8xf32>
    %cst_12 = arith.constant dense<0.000000e+00> : vector<8xf32>
    %30 = vector.multi_reduction <add>, %29, %cst_12 [1] : vector<8x8xf32> to vector<8xf32>
    %31 = vector.shape_cast %30 : vector<8xf32> to vector<8x1xf32>
    %cst_13 = arith.constant dense<0.000000e+00> : vector<8x8xf32>
    %32 = tpu.matmul %14, %15, %cst_13 {dimension_numbers = #tpu.dot_dimension_numbers<[1], [1], [0], [0], [0, 0, 1, 0], [], []>} : vector<8x32xf32>, vector<8x32xf32>, vector<8x8xf32> -> vector<8x8xf32>
    %33 = math.exp %32 : vector<8x8xf32>
    %cst_14 = arith.constant dense<0.000000e+00> : vector<8x8xf32>
    %34 = tpu.matmul %14, %16, %cst_14 {dimension_numbers = #tpu.dot_dimension_numbers<[1], [1], [0], [0], [0, 0, 1, 0], [], []>} : vector<8x32xf32>, vector<8x32xf32>, vector<8x8xf32> -> vector<8x8xf32>
    %35 = math.exp %34 : vector<8x8xf32>
    %cst_15 = arith.constant 0.000000e+00 : f32
    %36 = vector.broadcast %cst_15 : f32 to vector<8x8xf32>
    %37 = arith.select %22, %36, %35 : vector<8x8xi1>, vector<8x8xf32>
    %38 = arith.addf %33, %37 : vector<8x8xf32>
    %cst_16 = arith.constant dense<0.000000e+00> : vector<8xf32>
    %39 = vector.multi_reduction <add>, %38, %cst_16 [1] : vector<8x8xf32> to vector<8xf32>
    %40 = vector.shape_cast %39 : vector<8xf32> to vector<8x1xf32>
    %41 = math.log %31 : vector<8x1xf32>
    %42 = math.log %40 : vector<8x1xf32>
    %43 = arith.addf %41, %42 : vector<8x1xf32>
    %cst_17 = arith.constant 2.000000e+00 : f32
    %44 = vector.broadcast %cst_17 : f32 to vector<8x1xf32>
    %45 = arith.mulf %44, %10 : vector<8x1xf32>
    %46 = arith.subf %43, %45 : vector<8x1xf32>
    %c0_18 = arith.constant 0 : index
    %c0_19 = arith.constant 0 : index
    %47 = vector.load %arg3[%c0_18, %c0_19] : memref<8x1xf32, #tpu.memory_space<vmem>>, vector<8x1xf32>
    tpu.vector_store %arg3[%c0_18, %c0_19], %46 {strides = array<i32>} : memref<8x1xf32, #tpu.memory_space<vmem>>, vector<8x1xf32>,
    return
  }
  func.func @transform_0(%arg0: i32) -> (i32, i32) {
    %c0_i32 = arith.constant 0 : i32
    %c0_i32_0 = arith.constant 0 : i32
    %c0_i32_1 = arith.constant 0 : i32
    return %c0_i32, %c0_i32_0 : i32, i32
  }
  func.func @transform_1(%arg0: i32) -> (i32, i32) {
    %c0_i32 = arith.constant 0 : i32
    %c0_i32_0 = arith.constant 0 : i32
    %c0_i32_1 = arith.constant 0 : i32
    return %c0_i32, %c0_i32_0 : i32, i32
  }
  func.func @transform_2(%arg0: i32) -> (i32, i32) {
    %c0_i32 = arith.constant 0 : i32
    %c0_i32_0 = arith.constant 0 : i32
    return %arg0, %c0_i32 : i32, i32
  }
}

</mosaic_0001>

<llo_original>
// kernel: tpu_custom_call.1
$region0: #{tpu_custom_call.1}
  #allocation0 [shape = 'u32[]', space=smem, size = 0x4, offset = 0x4, fixed_abs, tag = 'smem constant byte address 0x4 - core index']
  #allocation1 [shape = 'u32[72,128]{1,0:T(1,128)}', space=vmem, size = 0x9000, scoped, tag = 'internal scratch']
  %s0 = inlined_call_operand.hbm [shape: f32[8,32], index: 0, kind: input, shape index: {}]
  %s1 = inlined_call_operand.hbm [shape: f32[8,32], index: 1, kind: input, shape index: {}]
  %s2 = inlined_call_operand.vmem [shape: f32[8,1], index: 2, kind: output, shape index: {}]
  %s3 = sld [smem:[#allocation0]]
  $region26: #{tpu_custom_call.1} parent=0
    _
  %s5 = ssub.s32 1, %s3
  %s6 = scalar_select 0, %s5, %s3
  $region1: #{tpu_custom_call.1} parent=0
    #allocation2 [shape = 'u8[4096]{0}', space=vmem, size = 0x1000, scoped, tag = 'input window, operand 0, single buffered']
    #allocation3 [shape = 's32[1]{0}', space=sflag, size = 0x4, scoped, tag = 'scoped memory for tpu_custom_call.1']
    #allocation4 [shape = 'u8[4096]{0}', space=vmem, size = 0x1000, scoped, tag = 'input window, operand 1, single buffered']
    #allocation5 [shape = 's32[1]{0}', space=sflag, size = 0x4, scoped, tag = 'scoped memory for tpu_custom_call.1']
    %7 = vsyncpa [#allocation3], 0
    %8 = vsyncpa [#allocation5], 0
    // Predicated region
    $region2: #{tpu_custom_call.1} parent=1 // pred_check
      _
    $region3: #{tpu_custom_call.1} parent=1 // pred_check_branch
      %10 = sbr.rel (0) target = $region5
    $region4: #{tpu_custom_call.1} parent=1 // pred_region
      %12 = vsyncadd [#allocation3], 0
      %s14 = sshll.u32 %s0, 4
      %s15 = int_to_ptr.hbm [resolvable:$true] %s14
      %s16 = sshll.u32 [#allocation2], 4
      %s17 = int_to_ptr.vmem [resolvable:$true] %s16
      %19 = dma.hbm_to_vmem [thread:$0]  %s15, 128, %s17, [#allocation3]
    $region5: #{tpu_custom_call.1} parent=1 // pred_fallthru
      _
    // Predicated region
    $region6: #{tpu_custom_call.1} parent=1 // pred_check
      _
    $region7: #{tpu_custom_call.1} parent=1 // pred_check_branch
      %21 = sbr.rel (0) target = $region9
    $region8: #{tpu_custom_call.1} parent=1 // pred_region
      %23 = vsyncadd [#allocation5], 0
      %s25 = sshll.u32 %s1, 4
      %s26 = int_to_ptr.hbm [resolvable:$true] %s25
      %s27 = sshll.u32 [#allocation4], 4
      %s28 = int_to_ptr.vmem [resolvable:$true] %s27
      %30 = dma.hbm_to_vmem [thread:$0]  %s26, 128, %s28, [#allocation5]
    $region9: #{tpu_custom_call.1} parent=1 // pred_fallthru
      _
    // Predicated region
    $region10: #{tpu_custom_call.1} parent=1 // pred_check
      _
    $region11: #{tpu_custom_call.1} parent=1 // pred_check_branch
      %32 = sbr.rel (0) target = $region13
    $region12: #{tpu_custom_call.1} parent=1 // pred_region
      %34 = dma.done [#allocation3], 128
    $region13: #{tpu_custom_call.1} parent=1 // pred_fallthru
      _
    // Predicated region
    $region14: #{tpu_custom_call.1} parent=1 // pred_check
      _
    $region15: #{tpu_custom_call.1} parent=1 // pred_check_branch
      %36 = sbr.rel (0) target = $region17
    $region16: #{tpu_custom_call.1} parent=1 // pred_region
      %38 = dma.done [#allocation5], 128
    $region17: #{tpu_custom_call.1} parent=1 // pred_fallthru
      _
    %s39 = smul.u32 0, 8
    %s40 = scalar_lea.vmem [#allocation2], %s39
    %v41 = vld [vmem:[%s40] sm:$0xff]
    %s42 = scalar_lea.vmem [#allocation4], %s39
    %v43 = vld [vmem:[%s42] sm:$0xff]
    %v44 = vmul.f32 %v41, %v43
    %vm45 = vcmask 261120
    %v46 = vsel %vm45, %v44, 0.0
    %47 = vadd.xlane.f32.xlu0 %v46
    %v48 = vpop.xlane.xlu0 %47
    %v49 = vmul.f32 %v48, 2.0
    %v50 = vmul.f32 %v41, 2.0
    %v51 = vmul.f32 %v43, 2.0
    %v52 = vld [vmem:[#allocation2] sm:$0xff]
    %v53 = vld [vmem:[#allocation4] sm:$0xff]
    %v54 = vlaneseq
    %v55 = vshrl.u32 %v54, 7
    %v56 = vstv %s39
    %v57 = vadd.s32 %v55, %v56
    %v58 = vlaneseq
    %v59 = vand.u32 %v58, 127
    %vm60 = vcmp.eq.s32.totalorder %v57, %v59
    %v62 = vsel %vm45, %v50, 0
    %v65 = vsel %vm45, %v52, 0
    %67 = vmatpush.xpose.msra.mxu0 0.0
    %68 = vmatpush.xpose.msra.mxu0 0.0
    %69 = vmatpush.xpose.msra.mxu0 0.0
    %70 = vmatpush.xpose.msra.mxu0 0.0
    %71 = vmatpush.xpose.msra.mxu0 0.0
    %72 = vmatpush.xpose.msra.mxu0 0.0
    %73 = vmatpush.xpose.msra.mxu0 0.0
    %74 = vmatpush.xpose.msra.mxu0 0.0
    %75 = vmatpush.xpose.msra.mxu0 0.0
    %76 = vmatpush.xpose.msra.mxu0 0.0
    %77 = vmatpush.xpose.msra.mxu0 0.0
    %78 = vmatpush.xpose.msra.mxu0 0.0
    %79 = vmatpush.xpose.msra.mxu0 0.0
    %80 = vmatpush.xpose.msra.mxu0 0.0
    %81 = vmatpush.xpose.msra.mxu0 0.0
    %82 = vmatpush.xpose.msra.mxu0 %v65
    %83 = vmatmul.f32.gmra.mxu0 %v62
    %v84 = vpop.f32.mrf.mxu0
    %v85 = vadd.f32 0.0, %v84
    %86 = vdwg.mxu0
    %v87 = vmul.f32 %v85, 1.442695
    %v88 = vpow.pop %v87
    %v89 = vsel %vm60, 0.0, %v88
    %v91 = vsel %vm45, %v53, 0
    %93 = vmatpush.xpose.msra.mxu0 0.0
    %94 = vmatpush.xpose.msra.mxu0 0.0
    %95 = vmatpush.xpose.msra.mxu0 0.0
    %96 = vmatpush.xpose.msra.mxu0 0.0
    %97 = vmatpush.xpose.msra.mxu0 0.0
    %98 = vmatpush.xpose.msra.mxu0 0.0
    %99 = vmatpush.xpose.msra.mxu0 0.0
    %100 = vmatpush.xpose.msra.mxu0 0.0
    %101 = vmatpush.xpose.msra.mxu0 0.0
    %102 = vmatpush.xpose.msra.mxu0 0.0
    %103 = vmatpush.xpose.msra.mxu0 0.0
    %104 = vmatpush.xpose.msra.mxu0 0.0
    %105 = vmatpush.xpose.msra.mxu0 0.0
    %106 = vmatpush.xpose.msra.mxu0 0.0
    %107 = vmatpush.xpose.msra.mxu0 0.0
    %108 = vmatpush.xpose.msra.mxu0 %v91
    %109 = vmatmul.f32.gmra.mxu0 %v62
    %v110 = vpop.f32.mrf.mxu0
    %v111 = vadd.f32 0.0, %v110
    %112 = vdwg.mxu0
    %v113 = vmul.f32 %v111, 1.442695
    %v114 = vpow.pop %v113
    %v115 = vadd.f32 %v89, %v114
    %vm116 = vcmask 64512
    %v117 = vsel %vm116, %v115, 0.0
    %118 = vadd.xlane.f32.xlu0 %v117
    %v119 = vpop.xlane.xlu0 %118
    %v121 = vsel %vm45, %v51, 0
    %123 = vmatpush.xpose.msra.mxu0 0.0
    %124 = vmatpush.xpose.msra.mxu0 0.0
    %125 = vmatpush.xpose.msra.mxu0 0.0
    %126 = vmatpush.xpose.msra.mxu0 0.0
    %127 = vmatpush.xpose.msra.mxu0 0.0
    %128 = vmatpush.xpose.msra.mxu0 0.0
    %129 = vmatpush.xpose.msra.mxu0 0.0
    %130 = vmatpush.xpose.msra.mxu0 0.0
    %131 = vmatpush.xpose.msra.mxu0 0.0
    %132 = vmatpush.xpose.msra.mxu0 0.0
    %133 = vmatpush.xpose.msra.mxu0 0.0
    %134 = vmatpush.xpose.msra.mxu0 0.0
    %135 = vmatpush.xpose.msra.mxu0 0.0
    %136 = vmatpush.xpose.msra.mxu0 0.0
    %137 = vmatpush.xpose.msra.mxu0 0.0
    %138 = vmatpush.xpose.msra.mxu0 %v65
    %139 = vmatmul.f32.gmra.mxu0 %v121
    %v140 = vpop.f32.mrf.mxu0
    %v141 = vadd.f32 0.0, %v140
    %142 = vdwg.mxu0
    %v143 = vmul.f32 %v141, 1.442695
    %v144 = vpow.pop %v143
    %145 = vmatpush.xpose.msra.mxu0 0.0
    %146 = vmatpush.xpose.msra.mxu0 0.0
    %147 = vmatpush.xpose.msra.mxu0 0.0
    %148 = vmatpush.xpose.msra.mxu0 0.0
    %149 = vmatpush.xpose.msra.mxu0 0.0
    %150 = vmatpush.xpose.msra.mxu0 0.0
    %151 = vmatpush.xpose.msra.mxu0 0.0
    %152 = vmatpush.xpose.msra.mxu0 0.0
    %153 = vmatpush.xpose.msra.mxu0 0.0
    %154 = vmatpush.xpose.msra.mxu0 0.0
    %155 = vmatpush.xpose.msra.mxu0 0.0
    %156 = vmatpush.xpose.msra.mxu0 0.0
    %157 = vmatpush.xpose.msra.mxu0 0.0
    %158 = vmatpush.xpose.msra.mxu0 0.0
    %159 = vmatpush.xpose.msra.mxu0 0.0
    %160 = vmatpush.xpose.msra.mxu0 %v91
    %161 = vmatmul.f32.gmra.mxu0 %v121
    %v162 = vpop.f32.mrf.mxu0
    %v163 = vadd.f32 0.0, %v162
    %164 = vdwg.mxu0
    %v165 = vmul.f32 %v163, 1.442695
    %v166 = vpow.pop %v165
    %v167 = vsel %vm60, 0.0, %v166
    %v168 = vadd.f32 %v144, %v167
    %v169 = vsel %vm116, %v168, 0.0
    %170 = vadd.xlane.f32.xlu0 %v169
    %v171 = vpop.xlane.xlu0 %170
    %v172 = vlog2.pop %v119
    %v173 = vmul.f32 %v172, 0.6931472
    %v174 = vlog2.pop %v171
    %v175 = vmul.f32 %v174, 0.6931472
    %v176 = vadd.f32 %v173, %v175
    %v177 = vmul.f32 %v49, 2.0
    %v178 = vsub.f32 %v176, %v177
    %vm179 = vcmask 7168
    %180 = vst.msk [vmem:[%s2] sm:$0xff] %vm179, %v178
    // Predicated region
    $region18: #{tpu_custom_call.1} parent=1 // pred_check
      _
    $region19: #{tpu_custom_call.1} parent=1 // pred_check_branch
      %182 = sbr.rel (0) target = $region21
    $region20: #{tpu_custom_call.1} parent=1 // pred_region
      _
    $region21: #{tpu_custom_call.1} parent=1 // pred_fallthru
      _
    // Predicated region
    $region22: #{tpu_custom_call.1} parent=1 // pred_check
      _
    $region23: #{tpu_custom_call.1} parent=1 // pred_check_branch
      %184 = sbr.rel (0) target = $region25
    $region24: #{tpu_custom_call.1} parent=1 // pred_region
      _
    $region25: #{tpu_custom_call.1} parent=1 // pred_fallthru
      _
    %185 = vsyncpa [#allocation3], 1
    %186 = vsyncpa [#allocation5], 1

// kernel: tpu_custom_call.1
$region0: #{tpu_custom_call.1}
  #allocation0 [shape = 'u32[]', space=smem, size = 0x4, offset = 0x4, fixed_abs, tag = 'smem constant byte address 0x4 - core index']
  #allocation1 [shape = 'u32[72,128]{1,0:T(1,128)}', space=vmem, size = 0x9000, scoped, tag = 'internal scratch']
  %s0 = inlined_call_operand.hbm [shape: f32[8,32], index: 0, kind: input, shape index: {}]
  %s1 = inlined_call_operand.hbm [shape: f32[8,32], index: 1, kind: input, shape index: {}]
  %s2 = inlined_call_operand.vmem [shape: f32[8,1], index: 2, kind: output, shape index: {}]
  %s3 = sld [smem:[#allocation0]]
  $region26: #{tpu_custom_call.1} parent=0
    _
  %s5 = ssub.s32 1, %s3
  %s6 = scalar_select 0, %s5, %s3
  $region1: #{tpu_custom_call.1} parent=0
    #allocation2 [shape = 'u8[4096]{0}', space=vmem, size = 0x1000, scoped, tag = 'input window, operand 0, single buffered']
    #allocation3 [shape = 's32[1]{0}', space=sflag, size = 0x4, scoped, tag = 'scoped memory for tpu_custom_call.1']
    #allocation4 [shape = 'u8[4096]{0}', space=vmem, size = 0x1000, scoped, tag = 'input window, operand 1, single buffered']
    #allocation5 [shape = 's32[1]{0}', space=sflag, size = 0x4, scoped, tag = 'scoped memory for tpu_custom_call.1']
    %7 = vsyncpa [#allocation3], 0
    %8 = vsyncpa [#allocation5], 0
    // Predicated region
    $region2: #{tpu_custom_call.1} parent=1 // pred_check
      _
    $region3: #{tpu_custom_call.1} parent=1 // pred_check_branch
      %10 = sbr.rel (0) target = $region5
    $region4: #{tpu_custom_call.1} parent=1 // pred_region
      %12 = vsyncadd [#allocation3], 0
      %s14 = sshll.u32 %s0, 4
      %s15 = int_to_ptr.hbm [resolvable:$true] %s14
      %s16 = sshll.u32 [#allocation2], 4
      %s17 = int_to_ptr.vmem [resolvable:$true] %s16
      %19 = dma.hbm_to_vmem [thread:$0]  %s15, 128, %s17, [#allocation3]
    $region5: #{tpu_custom_call.1} parent=1 // pred_fallthru
      _
    // Predicated region
    $region6: #{tpu_custom_call.1} parent=1 // pred_check
      _
    $region7: #{tpu_custom_call.1} parent=1 // pred_check_branch
      %21 = sbr.rel (0) target = $region9
    $region8: #{tpu_custom_call.1} parent=1 // pred_region
      %23 = vsyncadd [#allocation5], 0
      %s25 = sshll.u32 %s1, 4
      %s26 = int_to_ptr.hbm [resolvable:$true] %s25
      %s27 = sshll.u32 [#allocation4], 4
      %s28 = int_to_ptr.vmem [resolvable:$true] %s27
      %30 = dma.hbm_to_vmem [thread:$0]  %s26, 128, %s28, [#allocation5]
    $region9: #{tpu_custom_call.1} parent=1 // pred_fallthru
      _
    // Predicated region
    $region10: #{tpu_custom_call.1} parent=1 // pred_check
      _
    $region11: #{tpu_custom_call.1} parent=1 // pred_check_branch
      %32 = sbr.rel (0) target = $region13
    $region12: #{tpu_custom_call.1} parent=1 // pred_region
      %34 = dma.done [#allocation3], 128
    $region13: #{tpu_custom_call.1} parent=1 // pred_fallthru
      _
    // Predicated region
    $region14: #{tpu_custom_call.1} parent=1 // pred_check
      _
    $region15: #{tpu_custom_call.1} parent=1 // pred_check_branch
      %36 = sbr.rel (0) target = $region17
    $region16: #{tpu_custom_call.1} parent=1 // pred_region
      %38 = dma.done [#allocation5], 128
    $region17: #{tpu_custom_call.1} parent=1 // pred_fallthru
      _
    %s39 = smul.u32 0, 8
    %s40 = scalar_lea.vmem [#allocation2], %s39
    %v41 = vld [vmem:[%s40] sm:$0xff]
    %s42 = scalar_lea.vmem [#allocation4], %s39
    %v43 = vld [vmem:[%s42] sm:$0xff]
    %v44 = vmul.f32 %v41, %v43
    %vm45 = vcmask 261120
    %v46 = vsel %vm45, %v44, 0.0
    %47 = vadd.xlane.f32.xlu0 %v46
    %v48 = vpop.xlane.xlu0 %47
    %v49 = vmul.f32 %v48, 2.0
    %v50 = vmul.f32 %v41, 2.0
    %v51 = vmul.f32 %v43, 2.0
    %v52 = vld [vmem:[#allocation2] sm:$0xff]
    %v53 = vld [vmem:[#allocation4] sm:$0xff]
    %v54 = vlaneseq
    %v55 = vshrl.u32 %v54, 7
    %v56 = vstv %s39
    %v57 = vadd.s32 %v55, %v56
    %v58 = vlaneseq
    %v59 = vand.u32 %v58, 127
    %vm60 = vcmp.eq.s32.totalorder %v57, %v59
    %v62 = vsel %vm45, %v50, 0
    %v65 = vsel %vm45, %v52, 0
    %67 = vmatpush.xpose.msra.mxu0 0.0
    %68 = vmatpush.xpose.msra.mxu0 0.0
    %69 = vmatpush.xpose.msra.mxu0 0.0
    %70 = vmatpush.xpose.msra.mxu0 0.0
    %71 = vmatpush.xpose.msra.mxu0 0.0
    %72 = vmatpush.xpose.msra.mxu0 0.0
    %73 = vmatpush.xpose.msra.mxu0 0.0
    %74 = vmatpush.xpose.msra.mxu0 0.0
    %75 = vmatpush.xpose.msra.mxu0 0.0
    %76 = vmatpush.xpose.msra.mxu0 0.0
    %77 = vmatpush.xpose.msra.mxu0 0.0
    %78 = vmatpush.xpose.msra.mxu0 0.0
    %79 = vmatpush.xpose.msra.mxu0 0.0
    %80 = vmatpush.xpose.msra.mxu0 0.0
    %81 = vmatpush.xpose.msra.mxu0 0.0
    %82 = vmatpush.xpose.msra.mxu0 %v65
    %83 = vmatmul.f32.gmra.mxu0 %v62
    %v84 = vpop.f32.mrf.mxu0
    %v85 = vadd.f32 0.0, %v84
    %86 = vdwg.mxu0
    %v87 = vmul.f32 %v85, 1.442695
    %v88 = vpow.pop %v87
    %v89 = vsel %vm60, 0.0, %v88
    %v91 = vsel %vm45, %v53, 0
    %93 = vmatpush.xpose.msra.mxu0 0.0
    %94 = vmatpush.xpose.msra.mxu0 0.0
    %95 = vmatpush.xpose.msra.mxu0 0.0
    %96 = vmatpush.xpose.msra.mxu0 0.0
    %97 = vmatpush.xpose.msra.mxu0 0.0
    %98 = vmatpush.xpose.msra.mxu0 0.0
    %99 = vmatpush.xpose.msra.mxu0 0.0
    %100 = vmatpush.xpose.msra.mxu0 0.0
    %101 = vmatpush.xpose.msra.mxu0 0.0
    %102 = vmatpush.xpose.msra.mxu0 0.0
    %103 = vmatpush.xpose.msra.mxu0 0.0
    %104 = vmatpush.xpose.msra.mxu0 0.0
    %105 = vmatpush.xpose.msra.mxu0 0.0
    %106 = vmatpush.xpose.msra.mxu0 0.0
    %107 = vmatpush.xpose.msra.mxu0 0.0
    %108 = vmatpush.xpose.msra.mxu0 %v91
    %109 = vmatmul.f32.gmra.mxu0 %v62
    %v110 = vpop.f32.mrf.mxu0
    %v111 = vadd.f32 0.0, %v110
    %112 = vdwg.mxu0
    %v113 = vmul.f32 %v111, 1.442695
    %v114 = vpow.pop %v113
    %v115 = vadd.f32 %v89, %v114
    %vm116 = vcmask 64512
    %v117 = vsel %vm116, %v115, 0.0
    %118 = vadd.xlane.f32.xlu0 %v117
    %v119 = vpop.xlane.xlu0 %118
    %v121 = vsel %vm45, %v51, 0
    %123 = vmatpush.xpose.msra.mxu0 0.0
    %124 = vmatpush.xpose.msra.mxu0 0.0
    %125 = vmatpush.xpose.msra.mxu0 0.0
    %126 = vmatpush.xpose.msra.mxu0 0.0
    %127 = vmatpush.xpose.msra.mxu0 0.0
    %128 = vmatpush.xpose.msra.mxu0 0.0
    %129 = vmatpush.xpose.msra.mxu0 0.0
    %130 = vmatpush.xpose.msra.mxu0 0.0
    %131 = vmatpush.xpose.msra.mxu0 0.0
    %132 = vmatpush.xpose.msra.mxu0 0.0
    %133 = vmatpush.xpose.msra.mxu0 0.0
    %134 = vmatpush.xpose.msra.mxu0 0.0
    %135 = vmatpush.xpose.msra.mxu0 0.0
    %136 = vmatpush.xpose.msra.mxu0 0.0
    %137 = vmatpush.xpose.msra.mxu0 0.0
    %138 = vmatpush.xpose.msra.mxu0 %v65
    %139 = vmatmul.f32.gmra.mxu0 %v121
    %v140 = vpop.f32.mrf.mxu0
    %v141 = vadd.f32 0.0, %v140
    %142 = vdwg.mxu0
    %v143 = vmul.f32 %v141, 1.442695
    %v144 = vpow.pop %v143
    %145 = vmatpush.xpose.msra.mxu0 0.0
    %146 = vmatpush.xpose.msra.mxu0 0.0
    %147 = vmatpush.xpose.msra.mxu0 0.0
    %148 = vmatpush.xpose.msra.mxu0 0.0
    %149 = vmatpush.xpose.msra.mxu0 0.0
    %150 = vmatpush.xpose.msra.mxu0 0.0
    %151 = vmatpush.xpose.msra.mxu0 0.0
    %152 = vmatpush.xpose.msra.mxu0 0.0
    %153 = vmatpush.xpose.msra.mxu0 0.0
    %154 = vmatpush.xpose.msra.mxu0 0.0
    %155 = vmatpush.xpose.msra.mxu0 0.0
    %156 = vmatpush.xpose.msra.mxu0 0.0
    %157 = vmatpush.xpose.msra.mxu0 0.0
    %158 = vmatpush.xpose.msra.mxu0 0.0
    %159 = vmatpush.xpose.msra.mxu0 0.0
    %160 = vmatpush.xpose.msra.mxu0 %v91
    %161 = vmatmul.f32.gmra.mxu0 %v121
    %v162 = vpop.f32.mrf.mxu0
    %v163 = vadd.f32 0.0, %v162
    %164 = vdwg.mxu0
    %v165 = vmul.f32 %v163, 1.442695
    %v166 = vpow.pop %v165
    %v167 = vsel %vm60, 0.0, %v166
    %v168 = vadd.f32 %v144, %v167
    %v169 = vsel %vm116, %v168, 0.0
    %170 = vadd.xlane.f32.xlu0 %v169
    %v171 = vpop.xlane.xlu0 %170
    %v172 = vlog2.pop %v119
    %v173 = vmul.f32 %v172, 0.6931472
    %v174 = vlog2.pop %v171
    %v175 = vmul.f32 %v174, 0.6931472
    %v176 = vadd.f32 %v173, %v175
    %v177 = vmul.f32 %v49, 2.0
    %v178 = vsub.f32 %v176, %v177
    %vm179 = vcmask 7168
    %180 = vst.msk [vmem:[%s2] sm:$0xff] %vm179, %v178
    // Predicated region
    $region18: #{tpu_custom_call.1} parent=1 // pred_check
      _
    $region19: #{tpu_custom_call.1} parent=1 // pred_check_branch
      %182 = sbr.rel (0) target = $region21
    $region20: #{tpu_custom_call.1} parent=1 // pred_region
      _
    $region21: #{tpu_custom_call.1} parent=1 // pred_fallthru
      _
    // Predicated region
    $region22: #{tpu_custom_call.1} parent=1 // pred_check
      _
    $region23: #{tpu_custom_call.1} parent=1 // pred_check_branch
      %184 = sbr.rel (0) target = $region25
    $region24: #{tpu_custom_call.1} parent=1 // pred_region
      _
    $region25: #{tpu_custom_call.1} parent=1 // pred_fallthru
      _
    %185 = vsyncpa [#allocation3], 1
    %186 = vsyncpa [#allocation5], 1

</llo_original>
